<compile_context>
chip_gen: v7x
topology: tpu7x:2x2x1
jax: 0.10.0
libtpu: 0.0.40
codegen_flags: <defaults>
</compile_context>

<pallas_src>
import jax
import jax.numpy as jnp
from jax import lax
from jax.experimental import pallas as pl
from jax.experimental.pallas import tpu as pltpu

EPS = 1e-5
_VMEM_LIMIT_BYTES = 32 * 1024 * 1024          # safe on v5e/v6e (128 MiB) and v7x (64 MiB)


def _pick_tile_l(L, cin, cout, budget_bytes=12 * 1024 * 1024):
    """Largest lane-dense (multiple-of-128) tile dividing L that fits the VMEM budget."""
    per_l = 4 * 2 * (cin + cout)              # f32, double-buffered input + output blocks
    for t in (2048, 1024, 512, 256, 128):
        if L % t == 0 and t * per_l <= budget_bytes:
            return t
    return L                                   # small / non-128-multiple L: whole length


# ----------------------------------------------------------------------------
# Fused Conv1d(k=1) + BatchNorm1d(training stats) + ReLU, streaming two-phase BN.
# ----------------------------------------------------------------------------
def conv1x1_bn_relu(x, w, gamma, beta, *, tile_l=None):
    """x: (B, Cin, L), w: (Cout, Cin), gamma/beta: (Cout,).  Returns (B, Cout, L) f32."""
    B, Cin, L = x.shape
    Cout = w.shape[0]
    if tile_l is None:
        tile_l = _pick_tile_l(L, Cin, Cout)
    assert L % tile_l == 0, (L, tile_l)
    n_tiles = L // tile_l
    inv_n = 1.0 / float(B * L)                 # BN stats span batch AND length

    def kernel(x_ref, w_ref, g_ref, be_ref, o_ref,
               sum_ref, sq_ref, scale_ref, shift_ref):
        p = pl.program_id(0)                   # phase: 0 = stats pass, 1 = normalize pass
        bi = pl.program_id(1)                  # batch index
        ti = pl.program_id(2)                  # L-tile index
        is_first_tile = jnp.logical_and(bi == 0, ti == 0)

        @pl.when(jnp.logical_and(p == 0, is_first_tile))
        def _():
            sum_ref[...] = jnp.zeros_like(sum_ref)
            sq_ref[...] = jnp.zeros_like(sq_ref)

        # 1x1 conv (no bias: it is cancelled exactly by BN's mean subtraction).
        y = jnp.dot(w_ref[...], x_ref[...], preferred_element_type=jnp.float32)

        @pl.when(p == 0)
        def _():
            # single-pass stats: per-channel sum and sum of squares (XLU reductions)
            sum_ref[...] += jnp.sum(y, axis=1, keepdims=True)
            sq_ref[...] += jnp.sum(y * y, axis=1, keepdims=True)

        @pl.when(jnp.logical_and(p == 1, is_first_tile))
        def _():
            mean = sum_ref[...] * inv_n
            var = jnp.maximum(sq_ref[...] * inv_n - mean * mean, 0.0)   # biased variance
            scale = g_ref[...] * lax.rsqrt(var + EPS)
            scale_ref[...] = scale
            shift_ref[...] = be_ref[...] - mean * scale

        @pl.when(p == 1)
        def _():
            o_ref[...] = jnp.maximum(y * scale_ref[...] + shift_ref[...], 0.0)

    return pl.pallas_call(
        kernel,
        out_shape=jax.ShapeDtypeStruct((B, Cout, L), jnp.float32),
        grid=(2, B, n_tiles),
        in_specs=[
            pl.BlockSpec((pl.Squeezed(), Cin, tile_l), lambda p, b, t: (b, 0, t)),
            pl.BlockSpec((Cout, Cin), lambda p, b, t: (0, 0)),   # weight stays resident
            pl.BlockSpec((Cout, 1), lambda p, b, t: (0, 0)),
            pl.BlockSpec((Cout, 1), lambda p, b, t: (0, 0)),
        ],
        # During phase 0 the output block index collapses to (0,0,0) and the kernel never
        # writes it -> no spurious HBM writebacks; phase 1 writes each block exactly once,
        # lane-dense (tile_l is a multiple of 128 whenever L allows).
        out_specs=pl.BlockSpec((pl.Squeezed(), Cout, tile_l),
                               lambda p, b, t: (b * p, 0, t * p)),
        scratch_shapes=[pltpu.VMEM((Cout, 1), jnp.float32) for _ in range(4)],
        # Stats accumulate in a persistent per-core scratch across the whole grid, so all
        # axes must stay sequential ('arbitrary') for correctness.
        compiler_params=pltpu.CompilerParams(
            dimension_semantics=("arbitrary", "arbitrary", "arbitrary"),
            vmem_limit_bytes=_VMEM_LIMIT_BYTES),
    )(x, w, gamma.reshape(Cout, 1), beta.reshape(Cout, 1))


# ----------------------------------------------------------------------------
# is_batchnorm=False branch: Conv1d(k=1) + bias + ReLU, fully parallel grid
# (lets megacore / v7x shard it).
# ----------------------------------------------------------------------------
def conv1x1_relu(x, w, bias, *, tile_l=None):
    B, Cin, L = x.shape
    Cout = w.shape[0]
    if tile_l is None:
        tile_l = _pick_tile_l(L, Cin, Cout)
    assert L % tile_l == 0, (L, tile_l)
    n_tiles = L // tile_l

    def kernel(x_ref, w_ref, b_ref, o_ref):
        y = jnp.dot(w_ref[...], x_ref[...],
                    preferred_element_type=jnp.float32) + b_ref[...]
        o_ref[...] = jnp.maximum(y, 0.0)

    return pl.pallas_call(
        kernel,
        out_shape=jax.ShapeDtypeStruct((B, Cout, L), jnp.float32),
        grid=(B, n_tiles),
        in_specs=[
            pl.BlockSpec((pl.Squeezed(), Cin, tile_l), lambda b, t: (b, 0, t)),
            pl.BlockSpec((Cout, Cin), lambda b, t: (0, 0)),
            pl.BlockSpec((Cout, 1), lambda b, t: (0, 0)),
        ],
        out_specs=pl.BlockSpec((pl.Squeezed(), Cout, tile_l), lambda b, t: (b, 0, t)),
        compiler_params=pltpu.CompilerParams(
            dimension_semantics=("parallel", "parallel"),
            vmem_limit_bytes=_VMEM_LIMIT_BYTES),
    )(x, w, bias.reshape(Cout, 1))


# ----------------------------------------------------------------------------
# Module forward + params
# ----------------------------------------------------------------------------
def init_params(key, in_size, out_size):
    kw, kb = jax.random.split(key)
    return dict(
        w=0.1 * jax.random.normal(kw, (out_size, in_size), jnp.float32),  # Conv1d weight (k=1)
        b=0.1 * jax.random.normal(kb, (out_size,), jnp.float32),
        gamma=jnp.ones((out_size,), jnp.float32),   # fresh BatchNorm1d defaults
        beta=jnp.zeros((out_size,), jnp.float32),
    )


def unet_grid_gating_signal_1d(params, inputs, *, is_batchnorm=True, tile_l=None):
    # TODO(synk): only kernel_size=1 (the module default) is implemented.
    if is_batchnorm:
        # conv bias is mathematically absorbed by BatchNorm's mean subtraction
        return conv1x1_bn_relu(inputs, params["w"], params["gamma"], params["beta"],
                               tile_l=tile_l)
    return conv1x1_relu(inputs, params["w"], params["b"], tile_l=tile_l)


def _reference(params, x, is_batchnorm=True):
    y = jnp.einsum("oc,bcl->bol", params["w"], x) + params["b"][None, :, None]
    if is_batchnorm:
        mean = jnp.mean(y, axis=(0, 2), keepdims=True)
        var = jnp.mean(jnp.square(y - mean), axis=(0, 2), keepdims=True)  # biased
        y = (y - mean) * lax.rsqrt(var + EPS)
        y = y * params["gamma"][None, :, None] + params["beta"][None, :, None]
    return jnp.maximum(y, 0.0)


if __name__ == "__main__":
    key = jax.random.PRNGKey(0)
    k_p, k_x = jax.random.split(key)

    B, in_size, out_size, L = 2, 8, 4, 256
    x = jax.random.normal(k_x, (B, in_size, L), jnp.float32)
    params = init_params(k_p, in_size, out_size)

    # tile_l=128 exercises the multi-tile streaming-BN path at this small size.
    out = unet_grid_gating_signal_1d(params, x, is_batchnorm=True, tile_l=128)
    out = jax.block_until_ready(out)
    assert out.shape == (B, out_size, L), out.shape
    assert bool(jnp.all(jnp.isfinite(out)))
    ref = _reference(params, x, is_batchnorm=True)
    err = float(jnp.max(jnp.abs(out - ref)))
    assert bool(jnp.allclose(out, ref, atol=1e-2, rtol=1e-2)), f"BN path mismatch: {err}"

    # Default (auto) tile path: single 256-wide tile, stats still accumulate across batch.
    out_auto = jax.block_until_ready(
        unet_grid_gating_signal_1d(params, x, is_batchnorm=True))
    err_auto = float(jnp.max(jnp.abs(out_auto - ref)))
    assert bool(jnp.allclose(out_auto, ref, atol=1e-2, rtol=1e-2)), \
        f"BN auto-tile mismatch: {err_auto}"

    # is_batchnorm=False branch
    out_nb = unet_grid_gating_signal_1d(params, x, is_batchnorm=False, tile_l=128)
    out_nb = jax.block_until_ready(out_nb)
    ref_nb = _reference(params, x, is_batchnorm=False)
    err_nb = float(jnp.max(jnp.abs(out_nb - ref_nb)))
    assert bool(jnp.allclose(out_nb, ref_nb, atol=1e-2, rtol=1e-2)), f"no-BN mismatch: {err_nb}"

    print("KERNEL_OK")
</pallas_src>

<mosaic_0001>
module attributes {stable_mosaic.version = 11 : i64} {
  func.func @kernel(%arg0: i32, %arg1: i32, %arg2: i32, %arg3: memref<1x8x128xf32, #tpu.memory_space<vmem>>, %arg4: memref<4x8xf32, #tpu.memory_space<vmem>>, %arg5: memref<4x1xf32, #tpu.memory_space<vmem>>, %arg6: memref<4x1xf32, #tpu.memory_space<vmem>>, %arg7: memref<1x4x128xf32, #tpu.memory_space<vmem>>, %arg8: memref<4x1xf32, #tpu.memory_space<vmem>>, %arg9: memref<4x1xf32, #tpu.memory_space<vmem>>, %arg10: memref<4x1xf32, #tpu.memory_space<vmem>>, %arg11: memref<4x1xf32, #tpu.memory_space<vmem>>) attributes {dimension_semantics = [#tpu.dimension_semantics<arbitrary>, #tpu.dimension_semantics<arbitrary>, #tpu.dimension_semantics<arbitrary>], iteration_bounds = array<i64: 2, 2, 2>, scalar_prefetch = 0 : i64, scratch_operands = 4 : i64, tpu.core_type = #tpu.core_type<tc>, window_params = [{transform_indices = @transform_0, window_bounds = array<i64: 1, 8, 128>}, {pipeline_mode = #tpu.pipeline_mode<synchronous>, transform_indices = @transform_1, window_bounds = array<i64: 4, 8>}, {pipeline_mode = #tpu.pipeline_mode<synchronous>, transform_indices = @transform_2, window_bounds = array<i64: 4, 1>}, {pipeline_mode = #tpu.pipeline_mode<synchronous>, transform_indices = @transform_3, window_bounds = array<i64: 4, 1>}, {transform_indices = @transform_4, window_bounds = array<i64: 1, 4, 128>}]} {
    %c0_i32 = arith.constant 0 : i32
    %0 = arith.cmpi eq, %arg1, %c0_i32 : i32
    %c0_i32_0 = arith.constant 0 : i32
    %1 = arith.cmpi eq, %arg2, %c0_i32_0 : i32
    %2 = arith.andi %0, %1 : i1
    %c0_i32_1 = arith.constant 0 : i32
    %3 = arith.cmpi eq, %arg0, %c0_i32_1 : i32
    %4 = arith.andi %3, %2 : i1
    %5 = arith.extui %4 : i1 to i32
    %c0_i32_2 = arith.constant 0 : i32
    %6 = arith.cmpi ne, %5, %c0_i32_2 : i32
    scf.if %6 {
      %cst_12 = arith.constant 0.000000e+00 : f32
      %21 = vector.broadcast %cst_12 : f32 to vector<4x1xf32>
      %c0_13 = arith.constant 0 : index
      %c0_14 = arith.constant 0 : index
      %22 = vector.load %arg8[%c0_13, %c0_14] : memref<4x1xf32, #tpu.memory_space<vmem>>, vector<4x1xf32>
      tpu.vector_store %arg8[%c0_13, %c0_14], %21 {strides = array<i32>} : memref<4x1xf32, #tpu.memory_space<vmem>>, vector<4x1xf32>,
      %cst_15 = arith.constant 0.000000e+00 : f32
      %23 = vector.broadcast %cst_15 : f32 to vector<4x1xf32>
      %c0_16 = arith.constant 0 : index
      %c0_17 = arith.constant 0 : index
      %24 = vector.load %arg9[%c0_16, %c0_17] : memref<4x1xf32, #tpu.memory_space<vmem>>, vector<4x1xf32>
      tpu.vector_store %arg9[%c0_16, %c0_17], %23 {strides = array<i32>} : memref<4x1xf32, #tpu.memory_space<vmem>>, vector<4x1xf32>,
    } else {
    }
    %c0 = arith.constant 0 : index
    %c0_3 = arith.constant 0 : index
    %7 = vector.load %arg4[%c0, %c0_3] : memref<4x8xf32, #tpu.memory_space<vmem>>, vector<4x8xf32>
    %c0_4 = arith.constant 0 : index
    %c0_5 = arith.constant 0 : index
    %c0_6 = arith.constant 0 : index
    %8 = vector.load %arg3[%c0_4, %c0_5, %c0_6] : memref<1x8x128xf32, #tpu.memory_space<vmem>>, vector<1x8x128xf32>
    %9 = vector.shape_cast %8 : vector<1x8x128xf32> to vector<8x128xf32>
    %cst = arith.constant dense<0.000000e+00> : vector<4x128xf32>
    %10 = tpu.matmul %7, %9, %cst {dimension_numbers = #tpu.dot_dimension_numbers<[1], [0], [0], [1], [0, 0, 1, 1], [], []>} : vector<4x8xf32>, vector<8x128xf32>, vector<4x128xf32> -> vector<4x128xf32>
    %c0_i32_7 = arith.constant 0 : i32
    %11 = arith.cmpi eq, %arg0, %c0_i32_7 : i32
    %12 = arith.extui %11 : i1 to i32
    %c0_i32_8 = arith.constant 0 : i32
    %13 = arith.cmpi ne, %12, %c0_i32_8 : i32
    scf.if %13 {
      %c0_12 = arith.constant 0 : index
      %c0_13 = arith.constant 0 : index
      %21 = vector.load %arg8[%c0_12, %c0_13] : memref<4x1xf32, #tpu.memory_space<vmem>>, vector<4x1xf32>
      %cst_14 = arith.constant dense<0.000000e+00> : vector<4xf32>
      %22 = vector.multi_reduction <add>, %10, %cst_14 [1] : vector<4x128xf32> to vector<4xf32>
      %23 = vector.shape_cast %22 : vector<4xf32> to vector<4x1xf32>
      %24 = arith.addf %21, %23 : vector<4x1xf32>
      %c0_15 = arith.constant 0 : index
      %c0_16 = arith.constant 0 : index
      %25 = vector.load %arg8[%c0_15, %c0_16] : memref<4x1xf32, #tpu.memory_space<vmem>>, vector<4x1xf32>
      tpu.vector_store %arg8[%c0_15, %c0_16], %24 {strides = array<i32>} : memref<4x1xf32, #tpu.memory_space<vmem>>, vector<4x1xf32>,
      %c0_17 = arith.constant 0 : index
      %c0_18 = arith.constant 0 : index
      %26 = vector.load %arg9[%c0_17, %c0_18] : memref<4x1xf32, #tpu.memory_space<vmem>>, vector<4x1xf32>
      %27 = arith.mulf %10, %10 : vector<4x128xf32>
      %cst_19 = arith.constant dense<0.000000e+00> : vector<4xf32>
      %28 = vector.multi_reduction <add>, %27, %cst_19 [1] : vector<4x128xf32> to vector<4xf32>
      %29 = vector.shape_cast %28 : vector<4xf32> to vector<4x1xf32>
      %30 = arith.addf %26, %29 : vector<4x1xf32>
      %c0_20 = arith.constant 0 : index
      %c0_21 = arith.constant 0 : index
      %31 = vector.load %arg9[%c0_20, %c0_21] : memref<4x1xf32, #tpu.memory_space<vmem>>, vector<4x1xf32>
      tpu.vector_store %arg9[%c0_20, %c0_21], %30 {strides = array<i32>} : memref<4x1xf32, #tpu.memory_space<vmem>>, vector<4x1xf32>,
    } else {
    }
    %c1_i32 = arith.constant 1 : i32
    %14 = arith.cmpi eq, %arg0, %c1_i32 : i32
    %15 = arith.andi %14, %2 : i1
    %16 = arith.extui %15 : i1 to i32
    %c0_i32_9 = arith.constant 0 : i32
    %17 = arith.cmpi ne, %16, %c0_i32_9 : i32
    scf.if %17 {
      %c0_12 = arith.constant 0 : index
      %c0_13 = arith.constant 0 : index
      %21 = vector.load %arg8[%c0_12, %c0_13] : memref<4x1xf32, #tpu.memory_space<vmem>>, vector<4x1xf32>
      %cst_14 = arith.constant 0.001953125 : f32
      %22 = vector.broadcast %cst_14 : f32 to vector<4x1xf32>
      %23 = arith.mulf %21, %22 : vector<4x1xf32>
      %c0_15 = arith.constant 0 : index
      %c0_16 = arith.constant 0 : index
      %24 = vector.load %arg9[%c0_15, %c0_16] : memref<4x1xf32, #tpu.memory_space<vmem>>, vector<4x1xf32>
      %cst_17 = arith.constant 0.001953125 : f32
      %25 = vector.broadcast %cst_17 : f32 to vector<4x1xf32>
      %26 = arith.mulf %24, %25 : vector<4x1xf32>
      %27 = arith.mulf %23, %23 : vector<4x1xf32>
      %28 = arith.subf %26, %27 : vector<4x1xf32>
      %cst_18 = arith.constant 0.000000e+00 : f32
      %29 = vector.broadcast %cst_18 : f32 to vector<4x1xf32>
      %30 = arith.maximumf %28, %29 : vector<4x1xf32>
      %c0_19 = arith.constant 0 : index
      %c0_20 = arith.constant 0 : index
      %31 = vector.load %arg5[%c0_19, %c0_20] : memref<4x1xf32, #tpu.memory_space<vmem>>, vector<4x1xf32>
      %cst_21 = arith.constant 9.99999974E-6 : f32
      %32 = vector.broadcast %cst_21 : f32 to vector<4x1xf32>
      %33 = arith.addf %30, %32 : vector<4x1xf32>
      %34 = math.rsqrt %33 : vector<4x1xf32>
      %35 = arith.mulf %31, %34 : vector<4x1xf32>
      %c0_22 = arith.constant 0 : index
      %c0_23 = arith.constant 0 : index
      %36 = vector.load %arg10[%c0_22, %c0_23] : memref<4x1xf32, #tpu.memory_space<vmem>>, vector<4x1xf32>
      tpu.vector_store %arg10[%c0_22, %c0_23], %35 {strides = array<i32>} : memref<4x1xf32, #tpu.memory_space<vmem>>, vector<4x1xf32>,
      %c0_24 = arith.constant 0 : index
      %c0_25 = arith.constant 0 : index
      %37 = vector.load %arg6[%c0_24, %c0_25] : memref<4x1xf32, #tpu.memory_space<vmem>>, vector<4x1xf32>
      %38 = arith.mulf %23, %35 : vector<4x1xf32>
      %39 = arith.subf %37, %38 : vector<4x1xf32>
      %c0_26 = arith.constant 0 : index
      %c0_27 = arith.constant 0 : index
      %40 = vector.load %arg11[%c0_26, %c0_27] : memref<4x1xf32, #tpu.memory_space<vmem>>, vector<4x1xf32>
      tpu.vector_store %arg11[%c0_26, %c0_27], %39 {strides = array<i32>} : memref<4x1xf32, #tpu.memory_space<vmem>>, vector<4x1xf32>,
    } else {
    }
    %c1_i32_10 = arith.constant 1 : i32
    %18 = arith.cmpi eq, %arg0, %c1_i32_10 : i32
    %19 = arith.extui %18 : i1 to i32
    %c0_i32_11 = arith.constant 0 : i32
    %20 = arith.cmpi ne, %19, %c0_i32_11 : i32
    scf.if %20 {
      %c0_12 = arith.constant 0 : index
      %c0_13 = arith.constant 0 : index
      %21 = vector.load %arg10[%c0_12, %c0_13] : memref<4x1xf32, #tpu.memory_space<vmem>>, vector<4x1xf32>
      %22 = vector.broadcast %21 : vector<4x1xf32> to vector<4x128xf32>
      %23 = arith.mulf %10, %22 : vector<4x128xf32>
      %c0_14 = arith.constant 0 : index
      %c0_15 = arith.constant 0 : index
      %24 = vector.load %arg11[%c0_14, %c0_15] : memref<4x1xf32, #tpu.memory_space<vmem>>, vector<4x1xf32>
      %25 = vector.broadcast %24 : vector<4x1xf32> to vector<4x128xf32>
      %26 = arith.addf %23, %25 : vector<4x128xf32>
      %cst_16 = arith.constant 0.000000e+00 : f32
      %27 = vector.broadcast %cst_16 : f32 to vector<4x128xf32>
      %28 = arith.maximumf %26, %27 : vector<4x128xf32>
      %c0_17 = arith.constant 0 : index
      %c0_18 = arith.constant 0 : index
      %c0_19 = arith.constant 0 : index
      %29 = vector.load %arg7[%c0_17, %c0_18, %c0_19] : memref<1x4x128xf32, #tpu.memory_space<vmem>>, vector<1x4x128xf32>
      %30 = vector.shape_cast %29 : vector<1x4x128xf32> to vector<4x128xf32>
      %31 = vector.shape_cast %28 : vector<4x128xf32> to vector<1x4x128xf32>
      tpu.vector_store %arg7[%c0_17, %c0_18, %c0_19], %31 {strides = array<i32>} : memref<1x4x128xf32, #tpu.memory_space<vmem>>, vector<1x4x128xf32>,
    } else {
    }
    return
  }
  func.func @transform_0(%arg0: i32, %arg1: i32, %arg2: i32) -> (i32, i32, i32) {
    %c0_i32 = arith.constant 0 : i32
    %c0_i32_0 = arith.constant 0 : i32
    return %arg1, %c0_i32, %arg2 : i32, i32, i32
  }
  func.func @transform_1(%arg0: i32, %arg1: i32, %arg2: i32) -> (i32, i32) {
    %c0_i32 = arith.constant 0 : i32
    %c0_i32_0 = arith.constant 0 : i32
    %c0_i32_1 = arith.constant 0 : i32
    return %c0_i32, %c0_i32_0 : i32, i32
  }
  func.func @transform_2(%arg0: i32, %arg1: i32, %arg2: i32) -> (i32, i32) {
    %c0_i32 = arith.constant 0 : i32
    %c0_i32_0 = arith.constant 0 : i32
    %c0_i32_1 = arith.constant 0 : i32
    return %c0_i32, %c0_i32_0 : i32, i32
  }
  func.func @transform_3(%arg0: i32, %arg1: i32, %arg2: i32) -> (i32, i32) {
    %c0_i32 = arith.constant 0 : i32
    %c0_i32_0 = arith.constant 0 : i32
    %c0_i32_1 = arith.constant 0 : i32
    return %c0_i32, %c0_i32_0 : i32, i32
  }
  func.func @transform_4(%arg0: i32, %arg1: i32, %arg2: i32) -> (i32, i32, i32) {
    %0 = arith.muli %arg1, %arg0 : i32
    %1 = arith.muli %arg2, %arg0 : i32
    %c0_i32 = arith.constant 0 : i32
    %c0_i32_0 = arith.constant 0 : i32
    return %0, %c0_i32, %1 : i32, i32, i32
  }
}

</mosaic_0001>

<llo_original>
// kernel: tpu_custom_call.1
$region0: #{tpu_custom_call.1}
  #allocation0 [shape = 'u32[]', space=smem, size = 0x4, offset = 0x4, fixed_abs, tag = 'smem constant byte address 0x4 - core index']
  #allocation1 [shape = 'u32[144,128]{1,0:T(1,128)}', space=vmem, size = 0x12000, scoped, tag = 'internal scratch']
  #allocation2 [shape = 'f32[4,1]{1,0:T(4,128)}', space=vmem, size = 0x800, scoped, tag = 'scratch operand']
  #allocation3 [shape = 'f32[4,1]{1,0:T(4,128)}', space=vmem, size = 0x800, scoped, tag = 'scratch operand']
  #allocation4 [shape = 'f32[4,1]{1,0:T(4,128)}', space=vmem, size = 0x800, scoped, tag = 'scratch operand']
  #allocation5 [shape = 'f32[4,1]{1,0:T(4,128)}', space=vmem, size = 0x800, scoped, tag = 'scratch operand']
  %s0 = inlined_call_operand.hbm [shape: f32[2,8,256], index: 0, kind: input, shape index: {}]
  %s1 = inlined_call_operand.vmem [shape: f32[4,8], index: 1, kind: input, shape index: {}]
  %s2 = inlined_call_operand.vmem [shape: f32[4,1], index: 2, kind: input, shape index: {}]
  %s3 = inlined_call_operand.vmem [shape: f32[4,1], index: 3, kind: input, shape index: {}]
  %s4 = inlined_call_operand.hbm [shape: f32[2,4,256], index: 4, kind: output, shape index: {}]
  %s5 = sld [smem:[#allocation0]]
  $region69: #{tpu_custom_call.1} parent=0
    _
  %s7 = ssub.s32 1, %s5
  %s8 = scalar_select 0, %s7, %s5
  $region1: #{tpu_custom_call.1} parent=0
    #allocation6 [shape = 'u8[8192]{0}', space=vmem, size = 0x2000, scoped, tag = 'input window, operand 0']
    #allocation7 [shape = 's32[2]{0}', space=sflag, size = 0x8, scoped, tag = 'scoped memory for tpu_custom_call.1']
    #allocation8 [shape = 's32[2]{0}', space=sflag, size = 0x8, scoped, tag = 'scoped memory for tpu_custom_call.1']
    #allocation9 [shape = 'u8[4096]{0}', space=vmem, size = 0x1000, scoped, tag = 'output window, operand 0']
    %9 = vsyncpa [#allocation7], 0
    %s10 = scalar_lea.sflag [#allocation7], 1
    %11 = vsyncpa %s10, 0
    %12 = vsyncpa [#allocation8], 0
    %s13 = scalar_lea.sflag [#allocation8], 1
    %14 = vsyncpa %s13, 0
    loop: start=0, step=1, limit=10
    $region2: #{tpu_custom_call.1} parent=1 // loop_pre_header
      _
    $region3: #{tpu_custom_call.1} parent=1 // loop_header
      %s16 = sphi 0, %s20
      %p17 = scmp.ge.s32.totalorder %s16, 10
      %s23 = sphi 0, %s42
      %s24 = sphi 0, %s38
      %s25 = sphi 0, %s34
      %s26 = sphi 0, %s23
      %s27 = sphi 0, %s24
      %s28 = sphi 0, %s25
      %s29 = sphi 0, %s26
      %s30 = sphi 0, %s27
      %s31 = sphi 0, %s28
      %s47 = sphi 0, %s49
      %s50 = sphi 0, %s47
      %s51 = sphi 0, %s50
      %s67 = sphi 0, %s51
      %s71 = sphi 0, %s71
      %s73 = sphi 0, %s71
      %s74 = sphi 0, %s73
      %s88 = sphi 0, %s74
      %s92 = sphi 0, %s92
      %s94 = sphi 0, %s92
      %s95 = sphi 0, %s94
      %s109 = sphi 0, %s95
      %s113 = sphi 0, %s113
      %s115 = sphi 0, %s113
      %s116 = sphi 0, %s115
      %s130 = sphi 0, %s116
      %s142 = sphi 0, %s144
      %s145 = sphi 0, %s142
      %s146 = sphi 0, %s145
      %s162 = sphi 0, %s146
    $region4: #{tpu_custom_call.1} parent=1 // loop_header_branch
      %19 = sbr.rel (%p17) target = $region8
    $region5: #{tpu_custom_call.1} parent=1 // loop_body
      %s21 = ssub.s32 %s16, 1
      %s22 = ssub.s32 %s16, 2
      %s32 = sadd.s32 1, %s25
      %p33 = scmp.ge.s32.totalorder %s32, 2
      %s34 = scalar_select %p33, 0, %s32
      %s35 = sadd.s32 1, %s24
      %s36 = scalar_select %p33, %s35, %s24
      %p37 = scmp.ge.s32.totalorder %s36, 2
      %s38 = scalar_select %p37, 0, %s36
      %s39 = sadd.s32 1, %s23
      %s40 = scalar_select %p37, %s39, %s23
      %p41 = scmp.ge.s32.totalorder %s40, 2
      %s42 = scalar_select %p41, 0, %s40
      %s43 = ssub.s32 %s24, %s38
      %s44 = ssub.s32 %s25, %s34
      %s45 = sor.u32 %s43, %s44
      %p46 = scmp.eq.s32.totalorder %s45, 0
      %s48 = sadd.s32 %s47, 1
      %s49 = scalar_select %p46, %s47, %s48
      %p52 = pneg %p46
      %p53 = scmp.eq.s32.totalorder %s16, 7
      %p54 = por %p52, %p53
      %p55 = scmp.ne.s32.totalorder %s47, %s50
      %p56 = scmp.eq.s32.totalorder %s16, 0
      %p57 = por %p55, %p56
      %p58 = scmp.ne.s32.totalorder %s47, %s50
      %p59 = scmp.eq.s32.totalorder %s21, 7
      %p60 = por %p58, %p59
      %p61 = scmp.ne.s32.totalorder %s50, %s51
      %p62 = scmp.eq.s32.totalorder %s21, 0
      %p63 = por %p61, %p62
      %p64 = scmp.ne.s32.totalorder %s50, %s51
      %p65 = scmp.eq.s32.totalorder %s22, 7
      %p66 = por %p64, %p65
      %p68 = scmp.ne.s32.totalorder %s51, %s67
      %p69 = scmp.eq.s32.totalorder %s22, 0
      %p70 = por %p68, %p69
      %s72 = sadd.s32 %s71, 1
      %p75 = scmp.eq.s32.totalorder %s16, 7
      %p76 = scmp.ne.s32.totalorder %s71, %s73
      %p77 = scmp.eq.s32.totalorder %s16, 0
      %p78 = por %p76, %p77
      %p79 = scmp.ne.s32.totalorder %s71, %s73
      %p80 = scmp.eq.s32.totalorder %s21, 7
      %p81 = por %p79, %p80
      %p82 = scmp.ne.s32.totalorder %s73, %s74
      %p83 = scmp.eq.s32.totalorder %s21, 0
      %p84 = por %p82, %p83
      %p85 = scmp.ne.s32.totalorder %s73, %s74
      %p86 = scmp.eq.s32.totalorder %s22, 7
      %p87 = por %p85, %p86
      %p89 = scmp.ne.s32.totalorder %s74, %s88
      %p90 = scmp.eq.s32.totalorder %s22, 0
      %p91 = por %p89, %p90
      %s93 = sadd.s32 %s92, 1
      %p96 = scmp.eq.s32.totalorder %s16, 7
      %p97 = scmp.ne.s32.totalorder %s92, %s94
      %p98 = scmp.eq.s32.totalorder %s16, 0
      %p99 = por %p97, %p98
      %p100 = scmp.ne.s32.totalorder %s92, %s94
      %p101 = scmp.eq.s32.totalorder %s21, 7
      %p102 = por %p100, %p101
      %p103 = scmp.ne.s32.totalorder %s94, %s95
      %p104 = scmp.eq.s32.totalorder %s21, 0
      %p105 = por %p103, %p104
      %p106 = scmp.ne.s32.totalorder %s94, %s95
      %p107 = scmp.eq.s32.totalorder %s22, 7
      %p108 = por %p106, %p107
      %p110 = scmp.ne.s32.totalorder %s95, %s109
      %p111 = scmp.eq.s32.totalorder %s22, 0
      %p112 = por %p110, %p111
      %s114 = sadd.s32 %s113, 1
      %p117 = scmp.eq.s32.totalorder %s16, 7
      %p118 = scmp.ne.s32.totalorder %s113, %s115
      %p119 = scmp.eq.s32.totalorder %s16, 0
      %p120 = por %p118, %p119
      %p121 = scmp.ne.s32.totalorder %s113, %s115
      %p122 = scmp.eq.s32.totalorder %s21, 7
      %p123 = por %p121, %p122
      %p124 = scmp.ne.s32.totalorder %s115, %s116
      %p125 = scmp.eq.s32.totalorder %s21, 0
      %p126 = por %p124, %p125
      %p127 = scmp.ne.s32.totalorder %s115, %s116
      %p128 = scmp.eq.s32.totalorder %s22, 7
      %p129 = por %p127, %p128
      %p131 = scmp.ne.s32.totalorder %s116, %s130
      %p132 = scmp.eq.s32.totalorder %s22, 0
      %p133 = por %p131, %p132
      %s134 = smul.u32 %s24, %s23
      %s135 = smul.u32 %s25, %s23
      %s136 = smul.u32 %s38, %s42
      %s137 = smul.u32 %s34, %s42
      %s138 = ssub.s32 %s134, %s136
      %s139 = ssub.s32 %s135, %s137
      %s140 = sor.u32 %s138, %s139
      %p141 = scmp.eq.s32.totalorder %s140, 0
      %s143 = sadd.s32 %s142, 1
      %s144 = scalar_select %p141, %s142, %s143
      %p147 = pneg %p141
      %p148 = scmp.eq.s32.totalorder %s16, 7
      %p149 = por %p147, %p148
      %p150 = scmp.ne.s32.totalorder %s142, %s145
      %p151 = scmp.eq.s32.totalorder %s16, 0
      %p152 = por %p150, %p151
      %p153 = scmp.ne.s32.totalorder %s142, %s145
      %p154 = scmp.eq.s32.totalorder %s21, 7
      %p155 = por %p153, %p154
      %p156 = scmp.ne.s32.totalorder %s145, %s146
      %p157 = scmp.eq.s32.totalorder %s21, 0
      %p158 = por %p156, %p157
      %p159 = scmp.ne.s32.totalorder %s145, %s146
      %p160 = scmp.eq.s32.totalorder %s22, 7
      %p161 = por %p159, %p160
      %p163 = scmp.ne.s32.totalorder %s146, %s162
      %p164 = scmp.eq.s32.totalorder %s22, 0
      %p165 = por %p163, %p164
      %p166 = scmp.le.s32.totalorder 1, %s16
      %p167 = scmp.lt.s32.totalorder %s16, 9
      %p168 = pnand %p166, %p167
      %p169 = pneg %p168
      // Predicated region
      $region9: #{tpu_custom_call.1} parent=5 // pred_check
        _
      $region10: #{tpu_custom_call.1} parent=5 // pred_check_branch
        %171 = sbr.rel (%p168) target = $region12
      $region11: #{tpu_custom_call.1} parent=5 // pred_region
        %s172 = ssub.s32 %s16, 1
        // Predicated region
        $region13: #{tpu_custom_call.1} parent=11 // pred_check
          %p173 = pneg %p84
        $region14: #{tpu_custom_call.1} parent=11 // pred_check_branch
          %175 = sbr.rel (%p173) target = $region16
        $region15: #{tpu_custom_call.1} parent=11 // pred_region
          _
        $region16: #{tpu_custom_call.1} parent=11 // pred_fallthru
          _
        // Predicated region
        $region17: #{tpu_custom_call.1} parent=11 // pred_check
          %p176 = pneg %p105
        $region18: #{tpu_custom_call.1} parent=11 // pred_check_branch
          %178 = sbr.rel (%p176) target = $region20
        $region19: #{tpu_custom_call.1} parent=11 // pred_region
          _
        $region20: #{tpu_custom_call.1} parent=11 // pred_fallthru
          _
        // Predicated region
        $region21: #{tpu_custom_call.1} parent=11 // pred_check
          %p179 = pneg %p126
        $region22: #{tpu_custom_call.1} parent=11 // pred_check_branch
          %181 = sbr.rel (%p179) target = $region24
        $region23: #{tpu_custom_call.1} parent=11 // pred_region
          _
        $region24: #{tpu_custom_call.1} parent=11 // pred_fallthru
          _
      $region12: #{tpu_custom_call.1} parent=5 // pred_fallthru
        _
      %p182 = scmp.lt.s32.totalorder %s16, 8
      // Predicated region
      $region25: #{tpu_custom_call.1} parent=5 // pred_check
        %p183 = pneg %p182
      $region26: #{tpu_custom_call.1} parent=5 // pred_check_branch
        %185 = sbr.rel (%p183) target = $region28
      $region27: #{tpu_custom_call.1} parent=5 // pred_region
        // Predicated region
        $region29: #{tpu_custom_call.1} parent=27 // pred_check
          %p186 = pneg %p57
        $region30: #{tpu_custom_call.1} parent=27 // pred_check_branch
          %188 = sbr.rel (%p186) target = $region32
        $region31: #{tpu_custom_call.1} parent=27 // pred_region
          %s189 = sand.u32 %s47, 1
          %s190 = scalar_lea.sflag [#allocation7], %s189
          %s191 = sand.u32 %s47, 1
          %s192 = smul.addr %s191, 8
          %s193 = scalar_lea.vmem [#allocation6], %s192
          %s195 = ssub.s32 128, 128
          %196 = vsyncadd %s190, %s195
          %s197 = smul.addr %s24, 2
          %s198 = sadd.s32 %s25, %s197
          %s199 = smul.addr %s198, 128
          %s200 = scalar_lea.hbm %s0, %s199
          %s202 = sshll.u32 %s193, 4
          %s203 = int_to_ptr.vmem [resolvable:$true] %s202
          %205 = dma.hbm_to_vmem [thread:$0]  %s200, 128, %s203, %s190
        $region32: #{tpu_custom_call.1} parent=27 // pred_fallthru
          _
      $region28: #{tpu_custom_call.1} parent=5 // pred_fallthru
        _
      %p206 = scmp.le.s32.totalorder 1, %s16
      %p207 = scmp.lt.s32.totalorder %s16, 9
      %p208 = pnand %p206, %p207
      %p209 = pneg %p208
      // Predicated region
      $region33: #{tpu_custom_call.1} parent=5 // pred_check
        _
      $region34: #{tpu_custom_call.1} parent=5 // pred_check_branch
        %211 = sbr.rel (%p208) target = $region36
      $region35: #{tpu_custom_call.1} parent=5 // pred_region
        %s212 = ssub.s32 %s16, 1
        %s213 = sand.u32 %s50, 1
        %s214 = scalar_lea.sflag [#allocation7], %s213
        %s215 = sand.u32 %s50, 1
        %s216 = smul.addr %s215, 8
        %s217 = scalar_lea.vmem [#allocation6], %s216
        // Predicated region
        $region37: #{tpu_custom_call.1} parent=35 // pred_check
          %p218 = pneg %p63
        $region38: #{tpu_custom_call.1} parent=35 // pred_check_branch
          %220 = sbr.rel (%p218) target = $region40
        $region39: #{tpu_custom_call.1} parent=35 // pred_region
          %221 = dma.done %s214, 128
        $region40: #{tpu_custom_call.1} parent=35 // pred_fallthru
          _
        %s222 = sand.u32 %s50, 1
        %s223 = scalar_lea.sflag [#allocation7], %s222
        %s224 = sand.u32 %s50, 1
        %s225 = smul.addr %s224, 8
        %s226 = scalar_lea.vmem [#allocation6], %s225
        %p227 = pneg %p63
        %p228 = pneg %p60
        %p229 = pneg %p84
        %p230 = pneg %p81
        %p231 = pneg %p105
        %p232 = pneg %p102
        %p233 = pneg %p126
        %p234 = pneg %p123
        %p235 = pneg %p158
        %p236 = pneg %p155
        %s237 = sand.u32 %s145, 1
        %s238 = scalar_lea.sflag [#allocation8], %s237
        %s239 = sand.u32 %s145, 1
        %s240 = smul.addr %s239, 4
        %s241 = scalar_lea.vmem [#allocation9], %s240
        %s242 = smul.u32 %s27, %s26
        %s243 = smul.u32 %s28, %s26
        %p244 = scmp.eq.s32.totalorder %s27, 0
        %p245 = scmp.eq.s32.totalorder %s28, 0
        %p246 = pnand %p244, %p245
        %p247 = pneg %p246
        %p248 = scmp.eq.s32.totalorder %s26, 0
        %p249 = pnand %p248, %p247
        %p250 = pneg %p249
        // Predicated region
        $region41: #{tpu_custom_call.1} parent=35 // pred_check
          _
        $region42: #{tpu_custom_call.1} parent=35 // pred_check_branch
          %252 = sbr.rel (%p249) target = $region44
        $region43: #{tpu_custom_call.1} parent=35 // pred_region
          %vm253 = vcmask 3072
          %254 = vst.msk [vmem:[#allocation2] sm:$0xf] %vm253, 0.0
          %255 = vst.msk [vmem:[#allocation3] sm:$0xf] %vm253, 0.0
        $region44: #{tpu_custom_call.1} parent=35 // pred_fallthru
          _
        %v256 = vld [vmem:[%s1] sm:$0xf]
        %v257 = vld [vmem:[%s217] sm:$0xff]
        %vm258 = vcmask 64512
        %v260 = vsel %vm258, %v256, 0
        %262 = vmatprep.subr.mxu0 0.0
        %263 = vmatpush1.msra.mxu0 %v257
        %264 = vmatprep.subr.mxu0 0.0
        %265 = vmatpush1.msra.mxu0 0.0
        %266 = vmatprep.subr.mxu0 0.0
        %267 = vmatpush1.msra.mxu0 0.0
        %268 = vmatprep.subr.mxu0 0.0
        %269 = vmatpush1.msra.mxu0 0.0
        %270 = vmatprep.subr.mxu0 0.0
        %271 = vmatpush1.msra.mxu0 0.0
        %272 = vmatprep.subr.mxu0 0.0
        %273 = vmatpush1.msra.mxu0 0.0
        %274 = vmatprep.subr.mxu0 0.0
        %275 = vmatpush1.msra.mxu0 0.0
        %276 = vmatprep.subr.mxu0 0.0
        %277 = vmatpush1.msra.mxu0 0.0
        %278 = vmatprep.subr.mxu0 0.0
        %279 = vmatpush1.msra.mxu0 0.0
        %280 = vmatprep.subr.mxu0 0.0
        %281 = vmatpush1.msra.mxu0 0.0
        %282 = vmatprep.subr.mxu0 0.0
        %283 = vmatpush1.msra.mxu0 0.0
        %284 = vmatprep.subr.mxu0 0.0
        %285 = vmatpush1.msra.mxu0 0.0
        %286 = vmatprep.subr.mxu0 0.0
        %287 = vmatpush1.msra.mxu0 0.0
        %288 = vmatprep.subr.mxu0 0.0
        %289 = vmatpush1.msra.mxu0 0.0
        %290 = vmatprep.subr.mxu0 0.0
        %291 = vmatpush1.msra.mxu0 0.0
        %292 = vmatprep.subr.mxu0 0.0
        %293 = vmatpush1.msra.mxu0 0.0
        %294 = vmatprep.subr.mxu0 0.0
        %295 = vmatpush1.msra.mxu0 0.0
        %296 = vmatprep.subr.mxu0 0.0
        %297 = vmatpush1.msra.mxu0 0.0
        %298 = vmatprep.subr.mxu0 0.0
        %299 = vmatpush1.msra.mxu0 0.0
        %300 = vmatprep.subr.mxu0 0.0
        %301 = vmatpush1.msra.mxu0 0.0
        %302 = vmatprep.subr.mxu0 0.0
        %303 = vmatpush1.msra.mxu0 0.0
        %304 = vmatprep.subr.mxu0 0.0
        %305 = vmatpush1.msra.mxu0 0.0
        %306 = vmatprep.subr.mxu0 0.0
        %307 = vmatpush1.msra.mxu0 0.0
        %308 = vmatprep.subr.mxu0 0.0
        %309 = vmatpush1.msra.mxu0 0.0
        %310 = vmatprep.subr.mxu0 0.0
        %311 = vmatpush1.msra.mxu0 0.0
        %312 = vmatprep.subr.mxu0 0.0
        %313 = vmatpush1.msra.mxu0 0.0
        %314 = vmatprep.subr.mxu0 0.0
        %315 = vmatpush1.msra.mxu0 0.0
        %316 = vmatprep.subr.mxu0 0.0
        %317 = vmatpush1.msra.mxu0 0.0
        %318 = vmatprep.subr.mxu0 0.0
        %319 = vmatpush1.msra.mxu0 0.0
        %320 = vmatprep.subr.mxu0 0.0
        %321 = vmatpush1.msra.mxu0 0.0
        %322 = vmatprep.subr.mxu0 0.0
        %323 = vmatpush1.msra.mxu0 0.0
        %324 = vmatprep.subr.mxu0 0.0
        %325 = vmatpush1.msra.mxu0 0.0
        %326 = vmatprep.mubr.f32.mxu0 0.0
        %327 = vmatmul.mubr.f32.gmra.mrb[0].mxu0 %v260
        %v328 = vpop.f32.mrb[0].mxu0
        %v329 = vadd.f32 0.0, %v328
        %v330 = vpop.f32.mrb[0].mxu0
        %331 = vdwg.mxu0
        // Predicated region
        $region45: #{tpu_custom_call.1} parent=35 // pred_check
          %p332 = pneg %p248
        $region46: #{tpu_custom_call.1} parent=35 // pred_check_branch
          %334 = sbr.rel (%p332) target = $region48
        $region47: #{tpu_custom_call.1} parent=35 // pred_region
          %v335 = vld [vmem:[#allocation2] sm:$0xf]
          %vm336 = vcmask 1043456
          %v337 = vsel %vm336, %v329, 0.0
          %338 = vadd.xlane.f32.xlu0 %v337
          %v339 = vpop.xlane.xlu0 %338
          %v340 = vadd.f32 %v335, %v339
          %vm341 = vcmask 3072
          %342 = vst.msk [vmem:[#allocation2] sm:$0xf] %vm341, %v340
          %v343 = vld [vmem:[#allocation3] sm:$0xf]
          %v344 = vmul.f32 %v329, %v329
          %v345 = vsel %vm336, %v344, 0.0
          %346 = vadd.xlane.f32.xlu0 %v345
          %v347 = vpop.xlane.xlu0 %346
          %v348 = vadd.f32 %v343, %v347
          %349 = vst.msk [vmem:[#allocation3] sm:$0xf] %vm341, %v348
        $region48: #{tpu_custom_call.1} parent=35 // pred_fallthru
          _
        %p350 = scmp.eq.s32.totalorder %s26, 1
        %p351 = pnand %p350, %p247
        %p352 = pneg %p351
        // Predicated region
        $region49: #{tpu_custom_call.1} parent=35 // pred_check
          _
        $region50: #{tpu_custom_call.1} parent=35 // pred_check_branch
          %354 = sbr.rel (%p351) target = $region52
        $region51: #{tpu_custom_call.1} parent=35 // pred_region
          %v355 = vld [vmem:[#allocation2] sm:$0xf]
          %v356 = vmul.f32 %v355, 0.001953125
          %v357 = vld [vmem:[#allocation3] sm:$0xf]
          %v358 = vmul.f32 %v357, 0.001953125
          %v359 = vmul.f32 %v356, %v356
          %v360 = vsub.f32 %v358, %v359
          %v361 = vmax.f32 %v360, 0.0
          %v362 = vld [vmem:[%s2] sm:$0xf]
          %v363 = vadd.f32 %v361, 1e-05
          %v364 = vrsqrt.pop %v363
          %v365 = vmul.f32 %v362, %v364
          %vm366 = vcmask 3072
          %367 = vst.msk [vmem:[#allocation4] sm:$0xf] %vm366, %v365
          %v368 = vld [vmem:[%s3] sm:$0xf]
          %v369 = vmul.f32 %v356, %v365
          %v370 = vsub.f32 %v368, %v369
          %371 = vst.msk [vmem:[#allocation5] sm:$0xf] %vm366, %v370
        $region52: #{tpu_custom_call.1} parent=35 // pred_fallthru
          _
        // Predicated region
        $region53: #{tpu_custom_call.1} parent=35 // pred_check
          %p372 = pneg %p350
        $region54: #{tpu_custom_call.1} parent=35 // pred_check_branch
          %374 = sbr.rel (%p372) target = $region56
        $region55: #{tpu_custom_call.1} parent=35 // pred_region
          %v375 = vld [vmem:[#allocation4] sm:$0xf]
          %377 = vset.pattern.permute.xlu0 0
          %378 = vperm.xlu0 %377, %v375
          %v379 = vpop.permute.xlu0 %378
          %v381 = vmul.f32 %v329, %v379
          %v382 = vld [vmem:[#allocation5] sm:$0xf]
          %384 = vset.pattern.permute.xlu0 0
          %385 = vperm.xlu0 %384, %v382
          %v386 = vpop.permute.xlu0 %385
          %v388 = vadd.f32 %v381, %v386
          %v389 = vmax.f32 %v388, 0.0
          %390 = vst [vmem:[%s241] sm:$0xf] %v389
        $region56: #{tpu_custom_call.1} parent=35 // pred_fallthru
          _
        %s391 = sand.u32 %s145, 1
        %s392 = scalar_lea.sflag [#allocation8], %s391
        %s393 = sand.u32 %s145, 1
        %s394 = smul.addr %s393, 4
        %s395 = scalar_lea.vmem [#allocation9], %s394
        // Predicated region
        $region57: #{tpu_custom_call.1} parent=35 // pred_check
          %p396 = pneg %p155
        $region58: #{tpu_custom_call.1} parent=35 // pred_check_branch
          %398 = sbr.rel (%p396) target = $region60
        $region59: #{tpu_custom_call.1} parent=35 // pred_region
          %s399 = smul.u32 %s27, %s26
          %s400 = smul.u32 %s28, %s26
          %s402 = ssub.s32 64, 64
          %403 = vsyncadd %s392, %s402
          %s404 = smul.addr %s399, 2
          %s405 = sadd.s32 %s400, %s404
          %s406 = smul.addr %s405, 64
          %s407 = scalar_lea.hbm %s4, %s406
          %s409 = sshll.u32 %s395, 4
          %s410 = int_to_ptr.vmem [resolvable:$true] %s409
          %412 = dma.vmem_to_hbm [thread:$0]  %s410, 64, %s407, %s392
        $region60: #{tpu_custom_call.1} parent=35 // pred_fallthru
          _
      $region36: #{tpu_custom_call.1} parent=5 // pred_fallthru
        _
      %p413 = scmp.le.s32.totalorder 2, %s16
      // Predicated region
      $region61: #{tpu_custom_call.1} parent=5 // pred_check
        %p414 = pneg %p413
      $region62: #{tpu_custom_call.1} parent=5 // pred_check_branch
        %416 = sbr.rel (%p414) target = $region64
      $region63: #{tpu_custom_call.1} parent=5 // pred_region
        %s417 = ssub.s32 %s16, 2
        // Predicated region
        $region65: #{tpu_custom_call.1} parent=63 // pred_check
          %p418 = pneg %p161
        $region66: #{tpu_custom_call.1} parent=63 // pred_check_branch
          %420 = sbr.rel (%p418) target = $region68
        $region67: #{tpu_custom_call.1} parent=63 // pred_region
          %s421 = sand.u32 %s146, 1
          %s422 = scalar_lea.sflag [#allocation8], %s421
          %s423 = sand.u32 %s146, 1
          %s424 = smul.addr %s423, 4
          %s425 = scalar_lea.vmem [#allocation9], %s424
          %426 = dma.done %s422, 64
        $region68: #{tpu_custom_call.1} parent=63 // pred_fallthru
          _
      $region64: #{tpu_custom_call.1} parent=5 // pred_fallthru
        _
    $region6: #{tpu_custom_call.1} parent=1 // loop_footer
      %s20 = sadd.s32 1, %s16
    $region7: #{tpu_custom_call.1} parent=1 // loop_footer_branch
      %15 = sbr.rel target = $region3
    $region8: #{tpu_custom_call.1} parent=1 // loop_exit
      _
    %427 = vsyncpa [#allocation7], 1
    %s428 = scalar_lea.sflag [#allocation7], 1
    %429 = vsyncpa %s428, 1
    %430 = vsyncpa [#allocation8], 1
    %s431 = scalar_lea.sflag [#allocation8], 1
    %432 = vsyncpa %s431, 1

</llo_original>
